<compile_context>
chip_gen: v6e
topology: v6e:2x2x1
jax: 0.10.0
libtpu: 0.0.40
codegen_flags: <defaults>
</compile_context>

<pallas_src>
import jax
import jax.numpy as jnp
import numpy as np
from jax.experimental import pallas as pl
from jax.experimental.pallas import tpu as pltpu

_O_PAD = 128  # lane-dense output width (true out_feats sliced outside the kernel)


def mesh_arar_kernel(patch_ref, a_blk_ref, r_blk_ref, w1_ref, b1_ref, w2_ref,
                     b2_ref, out_ref):
    """One grid step = block_b meshes, kept in the flat (block_b*P, .) layout throughout."""
    # (1)+(2) patch-mean readout + GraphConv-1 dense part, fused into one MXU matmul:
    #         patch tile is (block_b*P, K*F) lane-dense; W1 is K-tiled & pre-scaled by 1/K.
    y = jnp.dot(patch_ref[...], w1_ref[...],
                preferred_element_type=jnp.float32)                     # (Bblk*P, H) f32

    # (3) Graph aggregation with the shared normalized adjacency as a block-diagonal
    #     matrix kron(I_Bblk, A_hat): one big MXU matmul instead of Bblk tiny ones.
    hidden = jnp.dot(a_blk_ref[...], y,
                     preferred_element_type=jnp.float32)                # (Bblk*P, H)
    hidden = jnp.maximum(hidden + b1_ref[...], 0.0)                     # bias + ReLU
    # TODO(synk): Dropout(p) is identity in eval mode; training-mode dropout not emitted.

    # (4) GraphConv-2 + mean-over-mesh-nodes, algebraically folded:
    #     mean_p(A @ (h @ W2) + b2) = ((R @ h) @ W2) + b2, R = kron(I_Bblk, r^T),
    #     r = (1/P) * 1^T A_hat.  Both steps stay on the MXU in the flat layout.
    g = jnp.dot(r_blk_ref[...], hidden,
                preferred_element_type=jnp.float32)                     # (Bblk, H)
    out_ref[...] = jnp.dot(g, w2_ref[...],
                           preferred_element_type=jnp.float32) + b2_ref[...]  # (Bblk, 128)


def mesh_network_arar(patch_feats, a_hat, w1, b1, w2, b2, *, block_b=16,
                      compute_dtype=jnp.float32):
    """Batched MeshNetworkARAR forward.

    patch_feats: (B, P, K, F) node features for B meshes x P spider patches x K nodes.
    a_hat:       (P, P) normalized mesh-graph adjacency (shared across the batch).
    compute_dtype: dtype of the pipelined patch stream / W1 (bf16 for v6e/v7x MXU peak;
                   accumulation stays f32 either way).
    Returns (B, out_feats); row b equals the module's (1, out_feats) output for mesh b.
    """
    B, P, K, F = patch_feats.shape
    H = w1.shape[1]
    O = w2.shape[1]
    KF = K * F

    # Pad the batch so the grid tiles evenly (padded rows sliced off at the end).
    if B < block_b:
        block_b = B
    B_pad = ((B + block_b - 1) // block_b) * block_b
    if B_pad != B:
        patch_feats = jnp.pad(
            patch_feats, ((0, B_pad - B), (0, 0), (0, 0), (0, 0)))

    # Flatten batch*patch onto the matmul M dim and K*F onto lanes (lane-dense).
    patch_flat = patch_feats.reshape(B_pad * P, KF).astype(compute_dtype)

    # ---- one-time algebraic folds (outside the kernel) -------------------------
    # Fold the 1/K patch mean into a K-tiled W1: row k*F+f of w1_tiled == w1[f] / K.
    w1_tiled = jnp.tile(w1.astype(jnp.float32) / K, (K, 1)).astype(compute_dtype)  # (K*F, H)
    a_hat32 = a_hat.astype(jnp.float32)
    a_blk = jnp.kron(jnp.eye(block_b, dtype=jnp.float32), a_hat32)    # (Bblk*P, Bblk*P)
    r = (jnp.sum(a_hat32, axis=0) / P).reshape(1, P)                  # fold mean + 2nd A matmul
    r_blk = jnp.kron(jnp.eye(block_b, dtype=jnp.float32), r)          # (Bblk, Bblk*P)
    w2_pad = jnp.zeros((H, _O_PAD), jnp.float32).at[:, :O].set(w2.astype(jnp.float32))
    b2_pad = jnp.zeros((1, _O_PAD), jnp.float32).at[:, :O].set(
        b2.reshape(1, O).astype(jnp.float32))
    b1_2d = b1.reshape(1, H).astype(jnp.float32)

    n_steps = B_pad // block_b
    bp = block_b * P
    const = lambda i: (0, 0)  # VMEM-resident across the whole grid

    itemsize = jnp.dtype(compute_dtype).itemsize
    flops = 2 * (B_pad * P * KF * H            # dense GraphConv-1 matmul
                 + n_steps * bp * bp * H       # block-diagonal adjacency matmul
                 + B_pad * bp * H              # R @ hidden
                 + B_pad * H * _O_PAD)         # final W2 matmul
    bytes_accessed = (patch_flat.size * itemsize + a_blk.size * 4 + r_blk.size * 4
                      + w1_tiled.size * itemsize + b1_2d.size * 4 + w2_pad.size * 4
                      + b2_pad.size * 4 + B_pad * _O_PAD * 4)

    out = pl.pallas_call(
        mesh_arar_kernel,
        out_shape=jax.ShapeDtypeStruct((B_pad, _O_PAD), jnp.float32),
        grid_spec=pltpu.PrefetchScalarGridSpec(
            num_scalar_prefetch=0,
            grid=(n_steps,),
            in_specs=[
                pl.BlockSpec((bp, KF), lambda i: (i, 0)),   # the only pipelined stream
                pl.BlockSpec((bp, bp), const),
                pl.BlockSpec((block_b, bp), const),
                pl.BlockSpec((KF, H), const),
                pl.BlockSpec((1, H), const),
                pl.BlockSpec((H, _O_PAD), const),
                pl.BlockSpec((1, _O_PAD), const),
            ],
            out_specs=pl.BlockSpec((block_b, _O_PAD), lambda i: (i, 0)),
        ),
        compiler_params=pltpu.CompilerParams(
            dimension_semantics=("parallel",),   # shards the batch across v7x's 2 TCs
        ),
        cost_estimate=pl.CostEstimate(flops=int(flops), transcendentals=0,
                                      bytes_accessed=int(bytes_accessed)),
    )(patch_flat, a_blk, r_blk, w1_tiled, b1_2d, w2_pad, b2_pad)

    return out[:B, :O]


def build_normalized_adjacency(P, key):
    """Deterministic mesh graph: ring edges (both directions) + self loops with
    random edge weights, normalized DGL-GraphConv-style (norm='both') using
    UNWEIGHTED degrees: A_hat[i, j] = w_ij / sqrt(deg_i * deg_j)."""
    src = np.concatenate([np.arange(P), np.arange(P), np.arange(P)])
    dst = np.concatenate([(np.arange(P) + 1) % P, (np.arange(P) - 1) % P, np.arange(P)])
    weights = jax.random.uniform(key, (src.shape[0],), minval=0.5, maxval=1.5)
    A = jnp.zeros((P, P), jnp.float32).at[dst, src].set(weights)
    deg = jnp.sum(A != 0, axis=1).astype(jnp.float32)   # unweighted degree (symmetric graph)
    d_inv_sqrt = 1.0 / jnp.sqrt(deg)
    return A * d_inv_sqrt[:, None] * d_inv_sqrt[None, :]


if __name__ == "__main__":
    # Small shapes consistent with the module: B meshes, P mesh nodes (= #patches),
    # K nodes per spider patch, in_dim=32, hidden_dim=32, out_feats=8.
    B, P, K, in_dim, hidden_dim, out_feats = 32, 16, 8, 32, 32, 8

    key = jax.random.PRNGKey(0)
    k_feat, k_adj, k_w1, k_b1, k_w2, k_b2 = jax.random.split(key, 6)

    patch_feats = jax.random.normal(k_feat, (B, P, K, in_dim), jnp.float32)
    a_hat = build_normalized_adjacency(P, k_adj)

    # Deterministic parameter init (GraphConv weight shapes: (in, out), bias (out,)).
    w1 = jax.random.normal(k_w1, (in_dim, hidden_dim), jnp.float32) * (1.0 / np.sqrt(in_dim))
    b1 = jax.random.normal(k_b1, (hidden_dim,), jnp.float32) * 0.01
    w2 = jax.random.normal(k_w2, (hidden_dim, out_feats), jnp.float32) * (1.0 / np.sqrt(hidden_dim))
    b2 = jax.random.normal(k_b2, (out_feats,), jnp.float32) * 0.01

    # f32 path (bit-close to the reference).
    out = mesh_network_arar(patch_feats, a_hat, w1, b1, w2, b2, block_b=16)
    out = jax.block_until_ready(out)

    # Pure-JAX reference (un-folded math, per mesh) for sanity.
    x_ref = jnp.mean(patch_feats, axis=2)                                 # (B, P, F)
    h_ref = jnp.einsum('pq,bqh->bph', a_hat,
                       jnp.einsum('bpf,fh->bph', x_ref, w1)) + b1
    h_ref = jnp.maximum(h_ref, 0.0)
    z_ref = jnp.einsum('pq,bqo->bpo', a_hat,
                       jnp.einsum('bph,ho->bpo', h_ref, w2)) + b2
    ref = jnp.mean(z_ref, axis=1)                                         # (B, O)

    np.testing.assert_allclose(np.asarray(out), np.asarray(ref), rtol=5e-5, atol=5e-5)
    assert out.shape == (B, out_feats)

    # bf16 patch/W1 path (v6e/v7x MXU peak); inputs rounded, accumulation f32.
    out_bf16 = mesh_network_arar(patch_feats, a_hat, w1, b1, w2, b2, block_b=16,
                                 compute_dtype=jnp.bfloat16)
    out_bf16 = jax.block_until_ready(out_bf16)
    np.testing.assert_allclose(np.asarray(out_bf16), np.asarray(ref), rtol=5e-2, atol=5e-2)

    print("KERNEL_OK")
</pallas_src>

<mosaic_0001>
module attributes {stable_mosaic.version = 11 : i64} {
  func.func @mesh_arar_kernel(%arg0: i32, %arg1: memref<256x256xf32, #tpu.memory_space<vmem>>, %arg2: memref<256x256xf32, #tpu.memory_space<vmem>>, %arg3: memref<16x256xf32, #tpu.memory_space<vmem>>, %arg4: memref<256x32xf32, #tpu.memory_space<vmem>>, %arg5: memref<1x32xf32, #tpu.memory_space<vmem>>, %arg6: memref<32x128xf32, #tpu.memory_space<vmem>>, %arg7: memref<1x128xf32, #tpu.memory_space<vmem>>, %arg8: memref<16x128xf32, #tpu.memory_space<vmem>>) attributes {dimension_semantics = [#tpu.dimension_semantics<parallel>], iteration_bounds = array<i64: 2>, scalar_prefetch = 0 : i64, scratch_operands = 0 : i64, tpu.core_type = #tpu.core_type<tc>, window_params = [{transform_indices = @transform_0, window_bounds = array<i64: 256, 256>}, {pipeline_mode = #tpu.pipeline_mode<synchronous>, transform_indices = @transform_1, window_bounds = array<i64: 256, 256>}, {pipeline_mode = #tpu.pipeline_mode<synchronous>, transform_indices = @transform_2, window_bounds = array<i64: 16, 256>}, {pipeline_mode = #tpu.pipeline_mode<synchronous>, transform_indices = @transform_3, window_bounds = array<i64: 256, 32>}, {pipeline_mode = #tpu.pipeline_mode<synchronous>, transform_indices = @transform_4, window_bounds = array<i64: 1, 32>}, {pipeline_mode = #tpu.pipeline_mode<synchronous>, transform_indices = @transform_5, window_bounds = array<i64: 32, 128>}, {pipeline_mode = #tpu.pipeline_mode<synchronous>, transform_indices = @transform_6, window_bounds = array<i64: 1, 128>}, {transform_indices = @transform_7, window_bounds = array<i64: 16, 128>}]} {
    %c0 = arith.constant 0 : index
    %c0_0 = arith.constant 0 : index
    %0 = vector.load %arg1[%c0, %c0_0] : memref<256x256xf32, #tpu.memory_space<vmem>>, vector<256x256xf32>
    %c0_1 = arith.constant 0 : index
    %c0_2 = arith.constant 0 : index
    %1 = vector.load %arg4[%c0_1, %c0_2] : memref<256x32xf32, #tpu.memory_space<vmem>>, vector<256x32xf32>
    %cst = arith.constant dense<0.000000e+00> : vector<256x32xf32>
    %2 = tpu.matmul %0, %1, %cst {dimension_numbers = #tpu.dot_dimension_numbers<[1], [0], [0], [1], [0, 0, 1, 1], [], []>} : vector<256x256xf32>, vector<256x32xf32>, vector<256x32xf32> -> vector<256x32xf32>
    %c0_3 = arith.constant 0 : index
    %c0_4 = arith.constant 0 : index
    %3 = vector.load %arg2[%c0_3, %c0_4] : memref<256x256xf32, #tpu.memory_space<vmem>>, vector<256x256xf32>
    %cst_5 = arith.constant dense<0.000000e+00> : vector<256x32xf32>
    %4 = tpu.matmul %3, %2, %cst_5 {dimension_numbers = #tpu.dot_dimension_numbers<[1], [0], [0], [1], [0, 0, 1, 1], [], []>} : vector<256x256xf32>, vector<256x32xf32>, vector<256x32xf32> -> vector<256x32xf32>
    %c0_6 = arith.constant 0 : index
    %c0_7 = arith.constant 0 : index
    %5 = vector.load %arg5[%c0_6, %c0_7] : memref<1x32xf32, #tpu.memory_space<vmem>>, vector<1x32xf32>
    %6 = vector.broadcast %5 : vector<1x32xf32> to vector<256x32xf32>
    %7 = arith.addf %4, %6 : vector<256x32xf32>
    %cst_8 = arith.constant 0.000000e+00 : f32
    %8 = vector.broadcast %cst_8 : f32 to vector<256x32xf32>
    %9 = arith.maximumf %7, %8 : vector<256x32xf32>
    %c0_9 = arith.constant 0 : index
    %c0_10 = arith.constant 0 : index
    %10 = vector.load %arg3[%c0_9, %c0_10] : memref<16x256xf32, #tpu.memory_space<vmem>>, vector<16x256xf32>
    %cst_11 = arith.constant dense<0.000000e+00> : vector<16x32xf32>
    %11 = tpu.matmul %10, %9, %cst_11 {dimension_numbers = #tpu.dot_dimension_numbers<[1], [0], [0], [1], [0, 0, 1, 1], [], []>} : vector<16x256xf32>, vector<256x32xf32>, vector<16x32xf32> -> vector<16x32xf32>
    %c0_12 = arith.constant 0 : index
    %c0_13 = arith.constant 0 : index
    %12 = vector.load %arg6[%c0_12, %c0_13] : memref<32x128xf32, #tpu.memory_space<vmem>>, vector<32x128xf32>
    %cst_14 = arith.constant dense<0.000000e+00> : vector<16x128xf32>
    %13 = tpu.matmul %11, %12, %cst_14 {dimension_numbers = #tpu.dot_dimension_numbers<[1], [0], [0], [1], [0, 0, 1, 1], [], []>} : vector<16x32xf32>, vector<32x128xf32>, vector<16x128xf32> -> vector<16x128xf32>
    %c0_15 = arith.constant 0 : index
    %c0_16 = arith.constant 0 : index
    %14 = vector.load %arg7[%c0_15, %c0_16] : memref<1x128xf32, #tpu.memory_space<vmem>>, vector<1x128xf32>
    %15 = vector.broadcast %14 : vector<1x128xf32> to vector<16x128xf32>
    %16 = arith.addf %13, %15 : vector<16x128xf32>
    %c0_17 = arith.constant 0 : index
    %c0_18 = arith.constant 0 : index
    %17 = vector.load %arg8[%c0_17, %c0_18] : memref<16x128xf32, #tpu.memory_space<vmem>>, vector<16x128xf32>
    tpu.vector_store %arg8[%c0_17, %c0_18], %16 {strides = array<i32>} : memref<16x128xf32, #tpu.memory_space<vmem>>, vector<16x128xf32>,
    return
  }
  func.func @transform_0(%arg0: i32) -> (i32, i32) {
    %c0_i32 = arith.constant 0 : i32
    %c0_i32_0 = arith.constant 0 : i32
    return %arg0, %c0_i32 : i32, i32
  }
  func.func @transform_1(%arg0: i32) -> (i32, i32) {
    %c0_i32 = arith.constant 0 : i32
    %c0_i32_0 = arith.constant 0 : i32
    %c0_i32_1 = arith.constant 0 : i32
    return %c0_i32, %c0_i32_0 : i32, i32
  }
  func.func @transform_2(%arg0: i32) -> (i32, i32) {
    %c0_i32 = arith.constant 0 : i32
    %c0_i32_0 = arith.constant 0 : i32
    %c0_i32_1 = arith.constant 0 : i32
    return %c0_i32, %c0_i32_0 : i32, i32
  }
  func.func @transform_3(%arg0: i32) -> (i32, i32) {
    %c0_i32 = arith.constant 0 : i32
    %c0_i32_0 = arith.constant 0 : i32
    %c0_i32_1 = arith.constant 0 : i32
    return %c0_i32, %c0_i32_0 : i32, i32
  }
  func.func @transform_4(%arg0: i32) -> (i32, i32) {
    %c0_i32 = arith.constant 0 : i32
    %c0_i32_0 = arith.constant 0 : i32
    %c0_i32_1 = arith.constant 0 : i32
    return %c0_i32, %c0_i32_0 : i32, i32
  }
  func.func @transform_5(%arg0: i32) -> (i32, i32) {
    %c0_i32 = arith.constant 0 : i32
    %c0_i32_0 = arith.constant 0 : i32
    %c0_i32_1 = arith.constant 0 : i32
    return %c0_i32, %c0_i32_0 : i32, i32
  }
  func.func @transform_6(%arg0: i32) -> (i32, i32) {
    %c0_i32 = arith.constant 0 : i32
    %c0_i32_0 = arith.constant 0 : i32
    %c0_i32_1 = arith.constant 0 : i32
    return %c0_i32, %c0_i32_0 : i32, i32
  }
  func.func @transform_7(%arg0: i32) -> (i32, i32) {
    %c0_i32 = arith.constant 0 : i32
    %c0_i32_0 = arith.constant 0 : i32
    return %arg0, %c0_i32 : i32, i32
  }
}

</mosaic_0001>

<llo_original>
// kernel: tpu_custom_call.1
$region0: #{tpu_custom_call.1}
  #allocation0 [shape = 'u32[]', space=smem, size = 0x4, offset = 0x4, fixed_abs, tag = 'smem constant byte address 0x4 - core index']
  #allocation1 [shape = 'u32[144,128]{1,0:T(1,128)}', space=vmem, size = 0x12000, scoped, tag = 'internal scratch']
  %s0 = inlined_call_operand.hbm [shape: f32[512,256], index: 0, kind: input, shape index: {}]
  %s1 = inlined_call_operand.hbm [shape: f32[256,256], index: 1, kind: input, shape index: {}]
  %s2 = inlined_call_operand.vmem [shape: f32[16,256], index: 2, kind: input, shape index: {}]
  %s3 = inlined_call_operand.vmem [shape: f32[256,32], index: 3, kind: input, shape index: {}]
  %s4 = inlined_call_operand.vmem [shape: f32[1,32], index: 4, kind: input, shape index: {}]
  %s5 = inlined_call_operand.vmem [shape: f32[32,128], index: 5, kind: input, shape index: {}]
  %s6 = inlined_call_operand.vmem [shape: f32[1,128], index: 6, kind: input, shape index: {}]
  %s7 = inlined_call_operand.hbm [shape: f32[32,128], index: 7, kind: output, shape index: {}]
  %s8 = sld [smem:[#allocation0]]
  $region69: #{tpu_custom_call.1} parent=0
    _
  %s10 = ssub.s32 1, %s8
  %s11 = scalar_select 0, %s10, %s8
  $region1: #{tpu_custom_call.1} parent=0
    #allocation2 [shape = 'u8[524288]{0}', space=vmem, size = 0x80000, scoped, tag = 'input window, operand 0']
    #allocation3 [shape = 's32[2]{0}', space=sflag, size = 0x8, scoped, tag = 'scoped memory for tpu_custom_call.1']
    #allocation4 [shape = 's32[2]{0}', space=sflag, size = 0x8, scoped, tag = 'scoped memory for tpu_custom_call.1']
    #allocation5 [shape = 'u8[262144]{0}', space=vmem, size = 0x40000, scoped, tag = 'input window, operand 1, single buffered']
    #allocation6 [shape = 's32[1]{0}', space=sflag, size = 0x4, scoped, tag = 'scoped memory for tpu_custom_call.1']
    #allocation7 [shape = 'u8[16384]{0}', space=vmem, size = 0x4000, scoped, tag = 'output window, operand 0']
    %12 = vsyncpa [#allocation3], 0
    %s13 = scalar_lea.sflag [#allocation3], 1
    %14 = vsyncpa %s13, 0
    %15 = vsyncpa [#allocation6], 0
    %16 = vsyncpa [#allocation4], 0
    %s17 = scalar_lea.sflag [#allocation4], 1
    %18 = vsyncpa %s17, 0
    loop: start=0, step=1, limit=4
    $region2: #{tpu_custom_call.1} parent=1 // loop_pre_header
      _
    $region3: #{tpu_custom_call.1} parent=1 // loop_header
      %s20 = sphi 0, %s24
      %p21 = scmp.ge.s32.totalorder %s20, 4
      %s30 = sphi 0, %s32
      %s33 = sphi 0, %s30
      %s34 = sphi 0, %s33
      %s50 = sphi 0, %s34
      %s54 = sphi 0, %s54
      %s56 = sphi 0, %s54
      %s57 = sphi 0, %s56
      %s71 = sphi 0, %s57
      %s75 = sphi 0, %s75
      %s77 = sphi 0, %s75
      %s78 = sphi 0, %s77
      %s92 = sphi 0, %s78
      %s96 = sphi 0, %s96
      %s98 = sphi 0, %s96
      %s99 = sphi 0, %s98
      %s113 = sphi 0, %s99
      %s117 = sphi 0, %s117
      %s119 = sphi 0, %s117
      %s120 = sphi 0, %s119
      %s134 = sphi 0, %s120
      %s138 = sphi 0, %s138
      %s140 = sphi 0, %s138
      %s141 = sphi 0, %s140
      %s155 = sphi 0, %s141
      %s159 = sphi 0, %s159
      %s161 = sphi 0, %s159
      %s162 = sphi 0, %s161
      %s176 = sphi 0, %s162
      %s182 = sphi 0, %s184
      %s185 = sphi 0, %s182
      %s186 = sphi 0, %s185
      %s202 = sphi 0, %s186
    $region4: #{tpu_custom_call.1} parent=1 // loop_header_branch
      %23 = sbr.rel (%p21) target = $region8
    $region5: #{tpu_custom_call.1} parent=1 // loop_body
      %s25 = ssub.s32 %s20, 1
      %s26 = ssub.s32 %s20, 2
      %s27 = sadd.s32 %s20, 1
      %s28 = ssub.s32 %s20, %s27
      %p29 = scmp.eq.s32.totalorder %s28, 0
      %s31 = sadd.s32 %s30, 1
      %s32 = scalar_select %p29, %s30, %s31
      %p35 = pneg %p29
      %p36 = scmp.eq.s32.totalorder %s20, 1
      %p37 = por %p35, %p36
      %p38 = scmp.ne.s32.totalorder %s30, %s33
      %p39 = scmp.eq.s32.totalorder %s20, 0
      %p40 = por %p38, %p39
      %p41 = scmp.ne.s32.totalorder %s30, %s33
      %p42 = scmp.eq.s32.totalorder %s25, 1
      %p43 = por %p41, %p42
      %p44 = scmp.ne.s32.totalorder %s33, %s34
      %p45 = scmp.eq.s32.totalorder %s25, 0
      %p46 = por %p44, %p45
      %p47 = scmp.ne.s32.totalorder %s33, %s34
      %p48 = scmp.eq.s32.totalorder %s26, 1
      %p49 = por %p47, %p48
      %p51 = scmp.ne.s32.totalorder %s34, %s50
      %p52 = scmp.eq.s32.totalorder %s26, 0
      %p53 = por %p51, %p52
      %s55 = sadd.s32 %s54, 1
      %p58 = scmp.eq.s32.totalorder %s20, 1
      %p59 = scmp.ne.s32.totalorder %s54, %s56
      %p60 = scmp.eq.s32.totalorder %s20, 0
      %p61 = por %p59, %p60
      %p62 = scmp.ne.s32.totalorder %s54, %s56
      %p63 = scmp.eq.s32.totalorder %s25, 1
      %p64 = por %p62, %p63
      %p65 = scmp.ne.s32.totalorder %s56, %s57
      %p66 = scmp.eq.s32.totalorder %s25, 0
      %p67 = por %p65, %p66
      %p68 = scmp.ne.s32.totalorder %s56, %s57
      %p69 = scmp.eq.s32.totalorder %s26, 1
      %p70 = por %p68, %p69
      %p72 = scmp.ne.s32.totalorder %s57, %s71
      %p73 = scmp.eq.s32.totalorder %s26, 0
      %p74 = por %p72, %p73
      %s76 = sadd.s32 %s75, 1
      %p79 = scmp.eq.s32.totalorder %s20, 1
      %p80 = scmp.ne.s32.totalorder %s75, %s77
      %p81 = scmp.eq.s32.totalorder %s20, 0
      %p82 = por %p80, %p81
      %p83 = scmp.ne.s32.totalorder %s75, %s77
      %p84 = scmp.eq.s32.totalorder %s25, 1
      %p85 = por %p83, %p84
      %p86 = scmp.ne.s32.totalorder %s77, %s78
      %p87 = scmp.eq.s32.totalorder %s25, 0
      %p88 = por %p86, %p87
      %p89 = scmp.ne.s32.totalorder %s77, %s78
      %p90 = scmp.eq.s32.totalorder %s26, 1
      %p91 = por %p89, %p90
      %p93 = scmp.ne.s32.totalorder %s78, %s92
      %p94 = scmp.eq.s32.totalorder %s26, 0
      %p95 = por %p93, %p94
      %s97 = sadd.s32 %s96, 1
      %p100 = scmp.eq.s32.totalorder %s20, 1
      %p101 = scmp.ne.s32.totalorder %s96, %s98
      %p102 = scmp.eq.s32.totalorder %s20, 0
      %p103 = por %p101, %p102
      %p104 = scmp.ne.s32.totalorder %s96, %s98
      %p105 = scmp.eq.s32.totalorder %s25, 1
      %p106 = por %p104, %p105
      %p107 = scmp.ne.s32.totalorder %s98, %s99
      %p108 = scmp.eq.s32.totalorder %s25, 0
      %p109 = por %p107, %p108
      %p110 = scmp.ne.s32.totalorder %s98, %s99
      %p111 = scmp.eq.s32.totalorder %s26, 1
      %p112 = por %p110, %p111
      %p114 = scmp.ne.s32.totalorder %s99, %s113
      %p115 = scmp.eq.s32.totalorder %s26, 0
      %p116 = por %p114, %p115
      %s118 = sadd.s32 %s117, 1
      %p121 = scmp.eq.s32.totalorder %s20, 1
      %p122 = scmp.ne.s32.totalorder %s117, %s119
      %p123 = scmp.eq.s32.totalorder %s20, 0
      %p124 = por %p122, %p123
      %p125 = scmp.ne.s32.totalorder %s117, %s119
      %p126 = scmp.eq.s32.totalorder %s25, 1
      %p127 = por %p125, %p126
      %p128 = scmp.ne.s32.totalorder %s119, %s120
      %p129 = scmp.eq.s32.totalorder %s25, 0
      %p130 = por %p128, %p129
      %p131 = scmp.ne.s32.totalorder %s119, %s120
      %p132 = scmp.eq.s32.totalorder %s26, 1
      %p133 = por %p131, %p132
      %p135 = scmp.ne.s32.totalorder %s120, %s134
      %p136 = scmp.eq.s32.totalorder %s26, 0
      %p137 = por %p135, %p136
      %s139 = sadd.s32 %s138, 1
      %p142 = scmp.eq.s32.totalorder %s20, 1
      %p143 = scmp.ne.s32.totalorder %s138, %s140
      %p144 = scmp.eq.s32.totalorder %s20, 0
      %p145 = por %p143, %p144
      %p146 = scmp.ne.s32.totalorder %s138, %s140
      %p147 = scmp.eq.s32.totalorder %s25, 1
      %p148 = por %p146, %p147
      %p149 = scmp.ne.s32.totalorder %s140, %s141
      %p150 = scmp.eq.s32.totalorder %s25, 0
      %p151 = por %p149, %p150
      %p152 = scmp.ne.s32.totalorder %s140, %s141
      %p153 = scmp.eq.s32.totalorder %s26, 1
      %p154 = por %p152, %p153
      %p156 = scmp.ne.s32.totalorder %s141, %s155
      %p157 = scmp.eq.s32.totalorder %s26, 0
      %p158 = por %p156, %p157
      %s160 = sadd.s32 %s159, 1
      %p163 = scmp.eq.s32.totalorder %s20, 1
      %p164 = scmp.ne.s32.totalorder %s159, %s161
      %p165 = scmp.eq.s32.totalorder %s20, 0
      %p166 = por %p164, %p165
      %p167 = scmp.ne.s32.totalorder %s159, %s161
      %p168 = scmp.eq.s32.totalorder %s25, 1
      %p169 = por %p167, %p168
      %p170 = scmp.ne.s32.totalorder %s161, %s162
      %p171 = scmp.eq.s32.totalorder %s25, 0
      %p172 = por %p170, %p171
      %p173 = scmp.ne.s32.totalorder %s161, %s162
      %p174 = scmp.eq.s32.totalorder %s26, 1
      %p175 = por %p173, %p174
      %p177 = scmp.ne.s32.totalorder %s162, %s176
      %p178 = scmp.eq.s32.totalorder %s26, 0
      %p179 = por %p177, %p178
      %s180 = ssub.s32 %s20, %s27
      %p181 = scmp.eq.s32.totalorder %s180, 0
      %s183 = sadd.s32 %s182, 1
      %s184 = scalar_select %p181, %s182, %s183
      %p187 = pneg %p181
      %p188 = scmp.eq.s32.totalorder %s20, 1
      %p189 = por %p187, %p188
      %p190 = scmp.ne.s32.totalorder %s182, %s185
      %p191 = scmp.eq.s32.totalorder %s20, 0
      %p192 = por %p190, %p191
      %p193 = scmp.ne.s32.totalorder %s182, %s185
      %p194 = scmp.eq.s32.totalorder %s25, 1
      %p195 = por %p193, %p194
      %p196 = scmp.ne.s32.totalorder %s185, %s186
      %p197 = scmp.eq.s32.totalorder %s25, 0
      %p198 = por %p196, %p197
      %p199 = scmp.ne.s32.totalorder %s185, %s186
      %p200 = scmp.eq.s32.totalorder %s26, 1
      %p201 = por %p199, %p200
      %p203 = scmp.ne.s32.totalorder %s186, %s202
      %p204 = scmp.eq.s32.totalorder %s26, 0
      %p205 = por %p203, %p204
      %p206 = scmp.le.s32.totalorder 1, %s20
      %p207 = scmp.lt.s32.totalorder %s20, 3
      %p208 = pnand %p206, %p207
      %p209 = pneg %p208
      // Predicated region
      $region9: #{tpu_custom_call.1} parent=5 // pred_check
        _
      $region10: #{tpu_custom_call.1} parent=5 // pred_check_branch
        %211 = sbr.rel (%p208) target = $region12
      $region11: #{tpu_custom_call.1} parent=5 // pred_region
        %s212 = ssub.s32 %s20, 1
        // Predicated region
        $region13: #{tpu_custom_call.1} parent=11 // pred_check
          %p213 = pneg %p67
        $region14: #{tpu_custom_call.1} parent=11 // pred_check_branch
          %215 = sbr.rel (%p213) target = $region16
        $region15: #{tpu_custom_call.1} parent=11 // pred_region
          %s217 = ssub.s32 8192, 8192
          %218 = vsyncadd [#allocation6], %s217
          %s219 = sshll.u32 [#allocation5], 4
          %s220 = int_to_ptr.vmem [resolvable:$true] %s219
          %225 = dma.hbm_to_vmem [thread:$0]  %s1, 8192, %s220, [#allocation6], 256, 256, 16
        $region16: #{tpu_custom_call.1} parent=11 // pred_fallthru
          _
        // Predicated region
        $region17: #{tpu_custom_call.1} parent=11 // pred_check
          %p226 = pneg %p88
        $region18: #{tpu_custom_call.1} parent=11 // pred_check_branch
          %228 = sbr.rel (%p226) target = $region20
        $region19: #{tpu_custom_call.1} parent=11 // pred_region
          _
        $region20: #{tpu_custom_call.1} parent=11 // pred_fallthru
          _
        // Predicated region
        $region21: #{tpu_custom_call.1} parent=11 // pred_check
          %p229 = pneg %p109
        $region22: #{tpu_custom_call.1} parent=11 // pred_check_branch
          %231 = sbr.rel (%p229) target = $region24
        $region23: #{tpu_custom_call.1} parent=11 // pred_region
          _
        $region24: #{tpu_custom_call.1} parent=11 // pred_fallthru
          _
        // Predicated region
        $region25: #{tpu_custom_call.1} parent=11 // pred_check
          %p232 = pneg %p130
        $region26: #{tpu_custom_call.1} parent=11 // pred_check_branch
          %234 = sbr.rel (%p232) target = $region28
        $region27: #{tpu_custom_call.1} parent=11 // pred_region
          _
        $region28: #{tpu_custom_call.1} parent=11 // pred_fallthru
          _
        // Predicated region
        $region29: #{tpu_custom_call.1} parent=11 // pred_check
          %p235 = pneg %p151
        $region30: #{tpu_custom_call.1} parent=11 // pred_check_branch
          %237 = sbr.rel (%p235) target = $region32
        $region31: #{tpu_custom_call.1} parent=11 // pred_region
          _
        $region32: #{tpu_custom_call.1} parent=11 // pred_fallthru
          _
        // Predicated region
        $region33: #{tpu_custom_call.1} parent=11 // pred_check
          %p238 = pneg %p172
        $region34: #{tpu_custom_call.1} parent=11 // pred_check_branch
          %240 = sbr.rel (%p238) target = $region36
        $region35: #{tpu_custom_call.1} parent=11 // pred_region
          _
        $region36: #{tpu_custom_call.1} parent=11 // pred_fallthru
          _
      $region12: #{tpu_custom_call.1} parent=5 // pred_fallthru
        _
      %p241 = scmp.lt.s32.totalorder %s20, 2
      // Predicated region
      $region37: #{tpu_custom_call.1} parent=5 // pred_check
        %p242 = pneg %p241
      $region38: #{tpu_custom_call.1} parent=5 // pred_check_branch
        %244 = sbr.rel (%p242) target = $region40
      $region39: #{tpu_custom_call.1} parent=5 // pred_region
        // Predicated region
        $region41: #{tpu_custom_call.1} parent=39 // pred_check
          %p245 = pneg %p40
        $region42: #{tpu_custom_call.1} parent=39 // pred_check_branch
          %247 = sbr.rel (%p245) target = $region44
        $region43: #{tpu_custom_call.1} parent=39 // pred_region
          %s248 = sand.u32 %s30, 1
          %s249 = scalar_lea.sflag [#allocation3], %s248
          %s250 = sand.u32 %s30, 1
          %s251 = smul.addr %s250, 512
          %s252 = scalar_lea.vmem [#allocation2], %s251
          %s253 = smul.u32 32, %s20
          %s255 = ssub.s32 8192, 8192
          %256 = vsyncadd %s249, %s255
          %s257 = smul.addr %s253, 2
          %s258 = smul.addr %s257, 128
          %s259 = scalar_lea.hbm %s0, %s258
          %s260 = sshll.u32 %s252, 4
          %s261 = int_to_ptr.vmem [resolvable:$true] %s260
          %266 = dma.hbm_to_vmem [thread:$0]  %s259, 8192, %s261, %s249, 256, 256, 16
        $region44: #{tpu_custom_call.1} parent=39 // pred_fallthru
          _
      $region40: #{tpu_custom_call.1} parent=5 // pred_fallthru
        _
      %p267 = scmp.le.s32.totalorder 1, %s20
      %p268 = scmp.lt.s32.totalorder %s20, 3
      %p269 = pnand %p267, %p268
      %p270 = pneg %p269
      // Predicated region
      $region45: #{tpu_custom_call.1} parent=5 // pred_check
        _
      $region46: #{tpu_custom_call.1} parent=5 // pred_check_branch
        %272 = sbr.rel (%p269) target = $region48
      $region47: #{tpu_custom_call.1} parent=5 // pred_region
        %s273 = ssub.s32 %s20, 1
        %s274 = sand.u32 %s33, 1
        %s275 = scalar_lea.sflag [#allocation3], %s274
        %s276 = sand.u32 %s33, 1
        %s277 = smul.addr %s276, 512
        %s278 = scalar_lea.vmem [#allocation2], %s277
        // Predicated region
        $region49: #{tpu_custom_call.1} parent=47 // pred_check
          %p279 = pneg %p46
        $region50: #{tpu_custom_call.1} parent=47 // pred_check_branch
          %281 = sbr.rel (%p279) target = $region52
        $region51: #{tpu_custom_call.1} parent=47 // pred_region
          %282 = dma.done %s275, 8192
        $region52: #{tpu_custom_call.1} parent=47 // pred_fallthru
          _
        // Predicated region
        $region53: #{tpu_custom_call.1} parent=47 // pred_check
          %p283 = pneg %p67
        $region54: #{tpu_custom_call.1} parent=47 // pred_check_branch
          %285 = sbr.rel (%p283) target = $region56
        $region55: #{tpu_custom_call.1} parent=47 // pred_region
          %286 = dma.done [#allocation6], 8192
        $region56: #{tpu_custom_call.1} parent=47 // pred_fallthru
          _
        %s287 = sand.u32 %s33, 1
        %s288 = scalar_lea.sflag [#allocation3], %s287
        %s289 = sand.u32 %s33, 1
        %s290 = smul.addr %s289, 512
        %s291 = scalar_lea.vmem [#allocation2], %s290
        %p292 = pneg %p46
        %p293 = pneg %p43
        %p294 = pneg %p67
        %p295 = pneg %p64
        %p296 = pneg %p88
        %p297 = pneg %p85
        %p298 = pneg %p109
        %p299 = pneg %p106
        %p300 = pneg %p130
        %p301 = pneg %p127
        %p302 = pneg %p151
        %p303 = pneg %p148
        %p304 = pneg %p172
        %p305 = pneg %p169
        %p306 = pneg %p198
        %p307 = pneg %p195
        %s308 = sand.u32 %s185, 1
        %s309 = scalar_lea.sflag [#allocation4], %s308
        %s310 = sand.u32 %s185, 1
        %s311 = smul.addr %s310, 16
        %s312 = scalar_lea.vmem [#allocation7], %s311
        %s313 = smul.u32 32, %s25
        %s314 = smul.u32 2, %s25
        %v315 = vld [vmem:[%s278] sm:$0xff]
        %v316 = vld [vmem:[%s278 + $0x8] sm:$0xff]
        %v317 = vld [vmem:[%s278 + $0x10] sm:$0xff]
        %v318 = vld [vmem:[%s278 + $0x18] sm:$0xff]
        %v319 = vld [vmem:[%s278 + $0x20] sm:$0xff]
        %v320 = vld [vmem:[%s278 + $0x28] sm:$0xff]
        %v321 = vld [vmem:[%s278 + $0x30] sm:$0xff]
        %v322 = vld [vmem:[%s278 + $0x38] sm:$0xff]
        %v323 = vld [vmem:[%s278 + $0x40] sm:$0xff]
        %v324 = vld [vmem:[%s278 + $0x48] sm:$0xff]
        %v325 = vld [vmem:[%s278 + $0x50] sm:$0xff]
        %v326 = vld [vmem:[%s278 + $0x58] sm:$0xff]
        %v327 = vld [vmem:[%s278 + $0x60] sm:$0xff]
        %v328 = vld [vmem:[%s278 + $0x68] sm:$0xff]
        %v329 = vld [vmem:[%s278 + $0x70] sm:$0xff]
        %v330 = vld [vmem:[%s278 + $0x78] sm:$0xff]
        %v331 = vld [vmem:[%s278 + $0x80] sm:$0xff]
        %v332 = vld [vmem:[%s278 + $0x88] sm:$0xff]
        %v333 = vld [vmem:[%s278 + $0x90] sm:$0xff]
        %v334 = vld [vmem:[%s278 + $0x98] sm:$0xff]
        %v335 = vld [vmem:[%s278 + $0xa0] sm:$0xff]
        %v336 = vld [vmem:[%s278 + $0xa8] sm:$0xff]
        %v337 = vld [vmem:[%s278 + $0xb0] sm:$0xff]
        %v338 = vld [vmem:[%s278 + $0xb8] sm:$0xff]
        %v339 = vld [vmem:[%s278 + $0xc0] sm:$0xff]
        %v340 = vld [vmem:[%s278 + $0xc8] sm:$0xff]
        %v341 = vld [vmem:[%s278 + $0xd0] sm:$0xff]
        %v342 = vld [vmem:[%s278 + $0xd8] sm:$0xff]
        %v343 = vld [vmem:[%s278 + $0xe0] sm:$0xff]
        %v344 = vld [vmem:[%s278 + $0xe8] sm:$0xff]
        %v345 = vld [vmem:[%s278 + $0xf0] sm:$0xff]
        %v346 = vld [vmem:[%s278 + $0xf8] sm:$0xff]
        %v347 = vld [vmem:[%s278 + $0x100] sm:$0xff]
        %v348 = vld [vmem:[%s278 + $0x108] sm:$0xff]
        %v349 = vld [vmem:[%s278 + $0x110] sm:$0xff]
        %v350 = vld [vmem:[%s278 + $0x118] sm:$0xff]
        %v351 = vld [vmem:[%s278 + $0x120] sm:$0xff]
        %v352 = vld [vmem:[%s278 + $0x128] sm:$0xff]
        %v353 = vld [vmem:[%s278 + $0x130] sm:$0xff]
        %v354 = vld [vmem:[%s278 + $0x138] sm:$0xff]
        %v355 = vld [vmem:[%s278 + $0x140] sm:$0xff]
        %v356 = vld [vmem:[%s278 + $0x148] sm:$0xff]
        %v357 = vld [vmem:[%s278 + $0x150] sm:$0xff]
        %v358 = vld [vmem:[%s278 + $0x158] sm:$0xff]
        %v359 = vld [vmem:[%s278 + $0x160] sm:$0xff]
        %v360 = vld [vmem:[%s278 + $0x168] sm:$0xff]
        %v361 = vld [vmem:[%s278 + $0x170] sm:$0xff]
        %v362 = vld [vmem:[%s278 + $0x178] sm:$0xff]
        %v363 = vld [vmem:[%s278 + $0x180] sm:$0xff]
        %v364 = vld [vmem:[%s278 + $0x188] sm:$0xff]
        %v365 = vld [vmem:[%s278 + $0x190] sm:$0xff]
        %v366 = vld [vmem:[%s278 + $0x198] sm:$0xff]
        %v367 = vld [vmem:[%s278 + $0x1a0] sm:$0xff]
        %v368 = vld [vmem:[%s278 + $0x1a8] sm:$0xff]
        %v369 = vld [vmem:[%s278 + $0x1b0] sm:$0xff]
        %v370 = vld [vmem:[%s278 + $0x1b8] sm:$0xff]
        %v371 = vld [vmem:[%s278 + $0x1c0] sm:$0xff]
        %v372 = vld [vmem:[%s278 + $0x1c8] sm:$0xff]
        %v373 = vld [vmem:[%s278 + $0x1d0] sm:$0xff]
        %v374 = vld [vmem:[%s278 + $0x1d8] sm:$0xff]
        %v375 = vld [vmem:[%s278 + $0x1e0] sm:$0xff]
        %v376 = vld [vmem:[%s278 + $0x1e8] sm:$0xff]
        %v377 = vld [vmem:[%s278 + $0x1f0] sm:$0xff]
        %v378 = vld [vmem:[%s278 + $0x1f8] sm:$0xff]
        %v379 = vld [vmem:[%s3] sm:$0xff]
        %v380 = vld [vmem:[%s3 + $0x8] sm:$0xff]
        %v381 = vld [vmem:[%s3 + $0x10] sm:$0xff]
        %v382 = vld [vmem:[%s3 + $0x18] sm:$0xff]
        %v383 = vld [vmem:[%s3 + $0x20] sm:$0xff]
        %v384 = vld [vmem:[%s3 + $0x28] sm:$0xff]
        %v385 = vld [vmem:[%s3 + $0x30] sm:$0xff]
        %v386 = vld [vmem:[%s3 + $0x38] sm:$0xff]
        %v387 = vld [vmem:[%s3 + $0x40] sm:$0xff]
        %v388 = vld [vmem:[%s3 + $0x48] sm:$0xff]
        %v389 = vld [vmem:[%s3 + $0x50] sm:$0xff]
        %v390 = vld [vmem:[%s3 + $0x58] sm:$0xff]
        %v391 = vld [vmem:[%s3 + $0x60] sm:$0xff]
        %v392 = vld [vmem:[%s3 + $0x68] sm:$0xff]
        %v393 = vld [vmem:[%s3 + $0x70] sm:$0xff]
        %v394 = vld [vmem:[%s3 + $0x78] sm:$0xff]
        %v395 = vld [vmem:[%s3 + $0x80] sm:$0xff]
        %v396 = vld [vmem:[%s3 + $0x88] sm:$0xff]
        %v397 = vld [vmem:[%s3 + $0x90] sm:$0xff]
        %v398 = vld [vmem:[%s3 + $0x98] sm:$0xff]
        %v399 = vld [vmem:[%s3 + $0xa0] sm:$0xff]
        %v400 = vld [vmem:[%s3 + $0xa8] sm:$0xff]
        %v401 = vld [vmem:[%s3 + $0xb0] sm:$0xff]
        %v402 = vld [vmem:[%s3 + $0xb8] sm:$0xff]
        %v403 = vld [vmem:[%s3 + $0xc0] sm:$0xff]
        %v404 = vld [vmem:[%s3 + $0xc8] sm:$0xff]
        %v405 = vld [vmem:[%s3 + $0xd0] sm:$0xff]
        %v406 = vld [vmem:[%s3 + $0xd8] sm:$0xff]
        %v407 = vld [vmem:[%s3 + $0xe0] sm:$0xff]
        %v408 = vld [vmem:[%s3 + $0xe8] sm:$0xff]
        %v409 = vld [vmem:[%s3 + $0xf0] sm:$0xff]
        %v410 = vld [vmem:[%s3 + $0xf8] sm:$0xff]
        %411 = vmatprep.subr.mxu0 0.0
        %412 = vmatpush1.msra.mxu0 %v394
        %413 = vmatprep.subr.mxu0 0.0
        %414 = vmatpush1.msra.mxu0 %v393
        %415 = vmatprep.subr.mxu0 0.0
        %416 = vmatpush1.msra.mxu0 %v392
        %417 = vmatprep.subr.mxu0 0.0
        %418 = vmatpush1.msra.mxu0 %v391
        %419 = vmatprep.subr.mxu0 0.0
        %420 = vmatpush1.msra.mxu0 %v390
        %421 = vmatprep.subr.mxu0 0.0
        %422 = vmatpush1.msra.mxu0 %v389
        %423 = vmatprep.subr.mxu0 0.0
        %424 = vmatpush1.msra.mxu0 %v388
        %425 = vmatprep.subr.mxu0 0.0
        %426 = vmatpush1.msra.mxu0 %v387
        %427 = vmatprep.subr.mxu0 0.0
        %428 = vmatpush1.msra.mxu0 %v386
        %429 = vmatprep.subr.mxu0 0.0
        %430 = vmatpush1.msra.mxu0 %v385
        %431 = vmatprep.subr.mxu0 0.0
        %432 = vmatpush1.msra.mxu0 %v384
        %433 = vmatprep.subr.mxu0 0.0
        %434 = vmatpush1.msra.mxu0 %v383
        %435 = vmatprep.subr.mxu0 0.0
        %436 = vmatpush1.msra.mxu0 %v382
        %437 = vmatprep.subr.mxu0 0.0
        %438 = vmatpush1.msra.mxu0 %v381
        %439 = vmatprep.subr.mxu0 0.0
        %440 = vmatpush1.msra.mxu0 %v380
        %441 = vmatprep.subr.mxu0 0.0
        %442 = vmatpush1.msra.mxu0 %v379
        %443 = vmatprep.subr.mxu0 0.0
        %444 = vmatpush2.msra.mxu0 %v410
        %445 = vmatprep.subr.mxu0 0.0
        %446 = vmatpush2.msra.mxu0 %v409
        %447 = vmatprep.subr.mxu0 0.0
        %448 = vmatpush2.msra.mxu0 %v408
        %449 = vmatprep.subr.mxu0 0.0
        %450 = vmatpush2.msra.mxu0 %v407
        %451 = vmatprep.subr.mxu0 0.0
        %452 = vmatpush2.msra.mxu0 %v406
        %453 = vmatprep.subr.mxu0 0.0
        %454 = vmatpush2.msra.mxu0 %v405
        %455 = vmatprep.subr.mxu0 0.0
        %456 = vmatpush2.msra.mxu0 %v404
        %457 = vmatprep.subr.mxu0 0.0
        %458 = vmatpush2.msra.mxu0 %v403
        %459 = vmatprep.subr.mxu0 0.0
        %460 = vmatpush2.msra.mxu0 %v402
        %461 = vmatprep.subr.mxu0 0.0
        %462 = vmatpush2.msra.mxu0 %v401
        %463 = vmatprep.subr.mxu0 0.0
        %464 = vmatpush2.msra.mxu0 %v400
        %465 = vmatprep.subr.mxu0 0.0
        %466 = vmatpush2.msra.mxu0 %v399
        %467 = vmatprep.subr.mxu0 0.0
        %468 = vmatpush2.msra.mxu0 %v398
        %469 = vmatprep.subr.mxu0 0.0
        %470 = vmatpush2.msra.mxu0 %v397
        %471 = vmatprep.subr.mxu0 0.0
        %472 = vmatpush2.msra.mxu0 %v396
        %473 = vmatprep.subr.mxu0 0.0
        %474 = vmatpush2.msra.mxu0 %v395
        %475 = vmatprep.mubr.f32.mxu0 %v316
        %476 = vmatmul.mubr.f32.gmra.mxu0 %v315
        %v477 = vpop.f32.mrf.mxu0
        %v478 = vadd.f32 0.0, %v477
        %v479 = vpop.f32.mrf.mxu0
        %480 = vmatprep.mubr.f32.mxu0 %v318
        %481 = vmatmul.mubr.f32.gmra.mxu0 %v317
        %v482 = vpop.f32.mrf.mxu0
        %v483 = vadd.f32 0.0, %v482
        %v484 = vpop.f32.mrf.mxu0
        %485 = vmatprep.mubr.f32.mxu0 %v320
        %486 = vmatmul.mubr.f32.gmra.mxu0 %v319
        %v487 = vpop.f32.mrf.mxu0
        %v488 = vadd.f32 0.0, %v487
        %v489 = vpop.f32.mrf.mxu0
        %490 = vmatprep.mubr.f32.mxu0 %v322
        %491 = vmatmul.mubr.f32.gmra.mxu0 %v321
        %v492 = vpop.f32.mrf.mxu0
        %v493 = vadd.f32 0.0, %v492
        %v494 = vpop.f32.mrf.mxu0
        %495 = vmatprep.mubr.f32.mxu0 %v324
        %496 = vmatmul.mubr.f32.gmra.mxu0 %v323
        %v497 = vpop.f32.mrf.mxu0
        %v498 = vadd.f32 0.0, %v497
        %v499 = vpop.f32.mrf.mxu0
        %500 = vmatprep.mubr.f32.mxu0 %v326
        %501 = vmatmul.mubr.f32.gmra.mxu0 %v325
        %v502 = vpop.f32.mrf.mxu0
        %v503 = vadd.f32 0.0, %v502
        %v504 = vpop.f32.mrf.mxu0
        %505 = vmatprep.mubr.f32.mxu0 %v328
        %506 = vmatmul.mubr.f32.gmra.mxu0 %v327
        %v507 = vpop.f32.mrf.mxu0
        %v508 = vadd.f32 0.0, %v507
        %v509 = vpop.f32.mrf.mxu0
        %510 = vmatprep.mubr.f32.mxu0 %v330
        %511 = vmatmul.mubr.f32.gmra.mxu0 %v329
        %v512 = vpop.f32.mrf.mxu0
        %v513 = vadd.f32 0.0, %v512
        %v514 = vpop.f32.mrf.mxu0
        %515 = vmatprep.mubr.f32.mxu0 %v332
        %516 = vmatmul.mubr.f32.gmra.mxu0 %v331
        %v517 = vpop.f32.mrf.mxu0
        %v518 = vadd.f32 0.0, %v517
        %v519 = vpop.f32.mrf.mxu0
        %520 = vmatprep.mubr.f32.mxu0 %v334
        %521 = vmatmul.mubr.f32.gmra.mxu0 %v333
        %v522 = vpop.f32.mrf.mxu0
        %v523 = vadd.f32 0.0, %v522
        %v524 = vpop.f32.mrf.mxu0
        %525 = vmatprep.mubr.f32.mxu0 %v336
        %526 = vmatmul.mubr.f32.gmra.mxu0 %v335
        %v527 = vpop.f32.mrf.mxu0
        %v528 = vadd.f32 0.0, %v527
        %v529 = vpop.f32.mrf.mxu0
        %530 = vmatprep.mubr.f32.mxu0 %v338
        %531 = vmatmul.mubr.f32.gmra.mxu0 %v337
        %v532 = vpop.f32.mrf.mxu0
        %v533 = vadd.f32 0.0, %v532
        %v534 = vpop.f32.mrf.mxu0
        %535 = vmatprep.mubr.f32.mxu0 %v340
        %536 = vmatmul.mubr.f32.gmra.mxu0 %v339
        %v537 = vpop.f32.mrf.mxu0
        %v538 = vadd.f32 0.0, %v537
        %v539 = vpop.f32.mrf.mxu0
        %540 = vmatprep.mubr.f32.mxu0 %v342
        %541 = vmatmul.mubr.f32.gmra.mxu0 %v341
        %v542 = vpop.f32.mrf.mxu0
        %v543 = vadd.f32 0.0, %v542
        %v544 = vpop.f32.mrf.mxu0
        %545 = vmatprep.mubr.f32.mxu0 %v344
        %546 = vmatmul.mubr.f32.gmra.mxu0 %v343
        %v547 = vpop.f32.mrf.mxu0
        %v548 = vadd.f32 0.0, %v547
        %v549 = vpop.f32.mrf.mxu0
        %550 = vmatprep.mubr.f32.mxu0 %v346
        %551 = vmatmul.mubr.f32.gmra.mxu0 %v345
        %v552 = vpop.f32.mrf.mxu0
        %v553 = vadd.f32 0.0, %v552
        %v554 = vpop.f32.mrf.mxu0
        %555 = vmatprep.mubr.f32.mxu0 %v348
        %556 = vmatmul.mubr.f32.gmra.mxu0 %v347
        %v557 = vpop.f32.mrf.mxu0
        %v558 = vadd.f32 0.0, %v557
        %v559 = vpop.f32.mrf.mxu0
        %560 = vmatprep.mubr.f32.mxu0 %v350
        %561 = vmatmul.mubr.f32.gmra.mxu0 %v349
        %v562 = vpop.f32.mrf.mxu0
        %v563 = vadd.f32 0.0, %v562
        %v564 = vpop.f32.mrf.mxu0
        %565 = vmatprep.mubr.f32.mxu0 %v352
        %566 = vmatmul.mubr.f32.gmra.mxu0 %v351
        %v567 = vpop.f32.mrf.mxu0
        %v568 = vadd.f32 0.0, %v567
        %v569 = vpop.f32.mrf.mxu0
        %570 = vmatprep.mubr.f32.mxu0 %v354
        %571 = vmatmul.mubr.f32.gmra.mxu0 %v353
        %v572 = vpop.f32.mrf.mxu0
        %v573 = vadd.f32 0.0, %v572
        %v574 = vpop.f32.mrf.mxu0
        %575 = vmatprep.mubr.f32.mxu0 %v356
        %576 = vmatmul.mubr.f32.gmra.mxu0 %v355
        %v577 = vpop.f32.mrf.mxu0
        %v578 = vadd.f32 0.0, %v577
        %v579 = vpop.f32.mrf.mxu0
        %580 = vmatprep.mubr.f32.mxu0 %v358
        %581 = vmatmul.mubr.f32.gmra.mxu0 %v357
        %v582 = vpop.f32.mrf.mxu0
        %v583 = vadd.f32 0.0, %v582
        %v584 = vpop.f32.mrf.mxu0
        %585 = vmatprep.mubr.f32.mxu0 %v360
        %586 = vmatmul.mubr.f32.gmra.mxu0 %v359
        %v587 = vpop.f32.mrf.mxu0
        %v588 = vadd.f32 0.0, %v587
        %v589 = vpop.f32.mrf.mxu0
        %590 = vmatprep.mubr.f32.mxu0 %v362
        %591 = vmatmul.mubr.f32.gmra.mxu0 %v361
        %v592 = vpop.f32.mrf.mxu0
        %v593 = vadd.f32 0.0, %v592
        %v594 = vpop.f32.mrf.mxu0
        %595 = vmatprep.mubr.f32.mxu0 %v364
        %596 = vmatmul.mubr.f32.gmra.mxu0 %v363
        %v597 = vpop.f32.mrf.mxu0
        %v598 = vadd.f32 0.0, %v597
        %v599 = vpop.f32.mrf.mxu0
        %600 = vmatprep.mubr.f32.mxu0 %v366
        %601 = vmatmul.mubr.f32.gmra.mxu0 %v365
        %v602 = vpop.f32.mrf.mxu0
        %v603 = vadd.f32 0.0, %v602
        %v604 = vpop.f32.mrf.mxu0
        %605 = vmatprep.mubr.f32.mxu0 %v368
        %606 = vmatmul.mubr.f32.gmra.mxu0 %v367
        %v607 = vpop.f32.mrf.mxu0
        %v608 = vadd.f32 0.0, %v607
        %v609 = vpop.f32.mrf.mxu0
        %610 = vmatprep.mubr.f32.mxu0 %v370
        %611 = vmatmul.mubr.f32.gmra.mxu0 %v369
        %v612 = vpop.f32.mrf.mxu0
        %v613 = vadd.f32 0.0, %v612
        %v614 = vpop.f32.mrf.mxu0
        %615 = vmatprep.mubr.f32.mxu0 %v372
        %616 = vmatmul.mubr.f32.gmra.mxu0 %v371
        %v617 = vpop.f32.mrf.mxu0
        %v618 = vadd.f32 0.0, %v617
        %v619 = vpop.f32.mrf.mxu0
        %620 = vmatprep.mubr.f32.mxu0 %v374
        %621 = vmatmul.mubr.f32.gmra.mxu0 %v373
        %v622 = vpop.f32.mrf.mxu0
        %v623 = vadd.f32 0.0, %v622
        %v624 = vpop.f32.mrf.mxu0
        %625 = vmatprep.mubr.f32.mxu0 %v376
        %626 = vmatmul.mubr.f32.gmra.mxu0 %v375
        %v627 = vpop.f32.mrf.mxu0
        %v628 = vadd.f32 0.0, %v627
        %v629 = vpop.f32.mrf.mxu0
        %630 = vmatprep.mubr.f32.mxu0 %v378
        %631 = vmatmul.mubr.f32.gmra.mxu0 %v377
        %v632 = vpop.f32.mrf.mxu0
        %v633 = vadd.f32 0.0, %v632
        %v634 = vpop.f32.mrf.mxu0
        %635 = vdwg.mxu0
        %v636 = vld [vmem:[#allocation5] sm:$0xff]
        %v637 = vld [vmem:[#allocation5 + $0x8] sm:$0xff]
        %v638 = vld [vmem:[#allocation5 + $0x10] sm:$0xff]
        %v639 = vld [vmem:[#allocation5 + $0x18] sm:$0xff]
        %v640 = vld [vmem:[#allocation5 + $0x20] sm:$0xff]
        %v641 = vld [vmem:[#allocation5 + $0x28] sm:$0xff]
        %v642 = vld [vmem:[#allocation5 + $0x30] sm:$0xff]
        %v643 = vld [vmem:[#allocation5 + $0x38] sm:$0xff]
        %v644 = vld [vmem:[#allocation5 + $0x40] sm:$0xff]
        %v645 = vld [vmem:[#allocation5 + $0x48] sm:$0xff]
        %v646 = vld [vmem:[#allocation5 + $0x50] sm:$0xff]
        %v647 = vld [vmem:[#allocation5 + $0x58] sm:$0xff]
        %v648 = vld [vmem:[#allocation5 + $0x60] sm:$0xff]
        %v649 = vld [vmem:[#allocation5 + $0x68] sm:$0xff]
        %v650 = vld [vmem:[#allocation5 + $0x70] sm:$0xff]
        %v651 = vld [vmem:[#allocation5 + $0x78] sm:$0xff]
        %v652 = vld [vmem:[#allocation5 + $0x80] sm:$0xff]
        %v653 = vld [vmem:[#allocation5 + $0x88] sm:$0xff]
        %v654 = vld [vmem:[#allocation5 + $0x90] sm:$0xff]
        %v655 = vld [vmem:[#allocation5 + $0x98] sm:$0xff]
        %v656 = vld [vmem:[#allocation5 + $0xa0] sm:$0xff]
        %v657 = vld [vmem:[#allocation5 + $0xa8] sm:$0xff]
        %v658 = vld [vmem:[#allocation5 + $0xb0] sm:$0xff]
        %v659 = vld [vmem:[#allocation5 + $0xb8] sm:$0xff]
        %v660 = vld [vmem:[#allocation5 + $0xc0] sm:$0xff]
        %v661 = vld [vmem:[#allocation5 + $0xc8] sm:$0xff]
        %v662 = vld [vmem:[#allocation5 + $0xd0] sm:$0xff]
        %v663 = vld [vmem:[#allocation5 + $0xd8] sm:$0xff]
        %v664 = vld [vmem:[#allocation5 + $0xe0] sm:$0xff]
        %v665 = vld [vmem:[#allocation5 + $0xe8] sm:$0xff]
        %v666 = vld [vmem:[#allocation5 + $0xf0] sm:$0xff]
        %v667 = vld [vmem:[#allocation5 + $0xf8] sm:$0xff]
        %v668 = vld [vmem:[#allocation5 + $0x100] sm:$0xff]
        %v669 = vld [vmem:[#allocation5 + $0x108] sm:$0xff]
        %v670 = vld [vmem:[#allocation5 + $0x110] sm:$0xff]
        %v671 = vld [vmem:[#allocation5 + $0x118] sm:$0xff]
        %v672 = vld [vmem:[#allocation5 + $0x120] sm:$0xff]
        %v673 = vld [vmem:[#allocation5 + $0x128] sm:$0xff]
        %v674 = vld [vmem:[#allocation5 + $0x130] sm:$0xff]
        %v675 = vld [vmem:[#allocation5 + $0x138] sm:$0xff]
        %v676 = vld [vmem:[#allocation5 + $0x140] sm:$0xff]
        %v677 = vld [vmem:[#allocation5 + $0x148] sm:$0xff]
        %v678 = vld [vmem:[#allocation5 + $0x150] sm:$0xff]
        %v679 = vld [vmem:[#allocation5 + $0x158] sm:$0xff]
        %v680 = vld [vmem:[#allocation5 + $0x160] sm:$0xff]
        %v681 = vld [vmem:[#allocation5 + $0x168] sm:$0xff]
        %v682 = vld [vmem:[#allocation5 + $0x170] sm:$0xff]
        %v683 = vld [vmem:[#allocation5 + $0x178] sm:$0xff]
        %v684 = vld [vmem:[#allocation5 + $0x180] sm:$0xff]
        %v685 = vld [vmem:[#allocation5 + $0x188] sm:$0xff]
        %v686 = vld [vmem:[#allocation5 + $0x190] sm:$0xff]
        %v687 = vld [vmem:[#allocation5 + $0x198] sm:$0xff]
        %v688 = vld [vmem:[#allocation5 + $0x1a0] sm:$0xff]
        %v689 = vld [vmem:[#allocation5 + $0x1a8] sm:$0xff]
        %v690 = vld [vmem:[#allocation5 + $0x1b0] sm:$0xff]
        %v691 = vld [vmem:[#allocation5 + $0x1b8] sm:$0xff]
        %v692 = vld [vmem:[#allocation5 + $0x1c0] sm:$0xff]
        %v693 = vld [vmem:[#allocation5 + $0x1c8] sm:$0xff]
        %v694 = vld [vmem:[#allocation5 + $0x1d0] sm:$0xff]
        %v695 = vld [vmem:[#allocation5 + $0x1d8] sm:$0xff]
        %v696 = vld [vmem:[#allocation5 + $0x1e0] sm:$0xff]
        %v697 = vld [vmem:[#allocation5 + $0x1e8] sm:$0xff]
        %v698 = vld [vmem:[#allocation5 + $0x1f0] sm:$0xff]
        %v699 = vld [vmem:[#allocation5 + $0x1f8] sm:$0xff]
        %v700 = vld [vmem:[%s4] sm:$0x1]
        %v702 = vlaneseq
        %v703 = vshrl.u32 %v702, 7
        %v704 = vsub.s32 0, %v703
        %v705 = vrot.slane %v700, %v704
        %707 = vmatprep.subr.mxu0 0.0
        %708 = vmatpush1.msra.mxu0 %v553
        %709 = vmatprep.subr.mxu0 0.0
        %710 = vmatpush1.msra.mxu0 %v548
        %711 = vmatprep.subr.mxu0 0.0
        %712 = vmatpush1.msra.mxu0 %v543
        %713 = vmatprep.subr.mxu0 0.0
        %714 = vmatpush1.msra.mxu0 %v538
        %715 = vmatprep.subr.mxu0 0.0
        %716 = vmatpush1.msra.mxu0 %v533
        %717 = vmatprep.subr.mxu0 0.0
        %718 = vmatpush1.msra.mxu0 %v528
        %719 = vmatprep.subr.mxu0 0.0
        %720 = vmatpush1.msra.mxu0 %v523
        %721 = vmatprep.subr.mxu0 0.0
        %722 = vmatpush1.msra.mxu0 %v518
        %723 = vmatprep.subr.mxu0 0.0
        %724 = vmatpush1.msra.mxu0 %v513
        %725 = vmatprep.subr.mxu0 0.0
        %726 = vmatpush1.msra.mxu0 %v508
        %727 = vmatprep.subr.mxu0 0.0
        %728 = vmatpush1.msra.mxu0 %v503
        %729 = vmatprep.subr.mxu0 0.0
        %730 = vmatpush1.msra.mxu0 %v498
        %731 = vmatprep.subr.mxu0 0.0
        %732 = vmatpush1.msra.mxu0 %v493
        %733 = vmatprep.subr.mxu0 0.0
        %734 = vmatpush1.msra.mxu0 %v488
        %735 = vmatprep.subr.mxu0 0.0
        %736 = vmatpush1.msra.mxu0 %v483
        %737 = vmatprep.subr.mxu0 0.0
        %738 = vmatpush1.msra.mxu0 %v478
        %739 = vmatprep.subr.mxu0 0.0
        %740 = vmatpush2.msra.mxu0 %v633
        %741 = vmatprep.subr.mxu0 0.0
        %742 = vmatpush2.msra.mxu0 %v628
        %743 = vmatprep.subr.mxu0 0.0
        %744 = vmatpush2.msra.mxu0 %v623
        %745 = vmatprep.subr.mxu0 0.0
        %746 = vmatpush2.msra.mxu0 %v618
        %747 = vmatprep.subr.mxu0 0.0
        %748 = vmatpush2.msra.mxu0 %v613
        %749 = vmatprep.subr.mxu0 0.0
        %750 = vmatpush2.msra.mxu0 %v608
        %751 = vmatprep.subr.mxu0 0.0
        %752 = vmatpush2.msra.mxu0 %v603
        %753 = vmatprep.subr.mxu0 0.0
        %754 = vmatpush2.msra.mxu0 %v598
        %755 = vmatprep.subr.mxu0 0.0
        %756 = vmatpush2.msra.mxu0 %v593
        %757 = vmatprep.subr.mxu0 0.0
        %758 = vmatpush2.msra.mxu0 %v588
        %759 = vmatprep.subr.mxu0 0.0
        %760 = vmatpush2.msra.mxu0 %v583
        %761 = vmatprep.subr.mxu0 0.0
        %762 = vmatpush2.msra.mxu0 %v578
        %763 = vmatprep.subr.mxu0 0.0
        %764 = vmatpush2.msra.mxu0 %v573
        %765 = vmatprep.subr.mxu0 0.0
        %766 = vmatpush2.msra.mxu0 %v568
        %767 = vmatprep.subr.mxu0 0.0
        %768 = vmatpush2.msra.mxu0 %v563
        %769 = vmatprep.subr.mxu0 0.0
        %770 = vmatpush2.msra.mxu0 %v558
        %771 = vmatprep.mubr.f32.mxu0 %v637
        %772 = vmatmul.mubr.f32.gmra.mxu0 %v636
        %v773 = vpop.f32.mrf.mxu0
        %v774 = vadd.f32 %v705, %v773
        %v775 = vpop.f32.mrf.mxu0
        %776 = vmatprep.mubr.f32.mxu0 %v639
        %777 = vmatmul.mubr.f32.gmra.mxu0 %v638
        %v778 = vpop.f32.mrf.mxu0
        %v779 = vadd.f32 %v705, %v778
        %v780 = vpop.f32.mrf.mxu0
        %781 = vmatprep.mubr.f32.mxu0 %v641
        %782 = vmatmul.mubr.f32.gmra.mxu0 %v640
        %v783 = vpop.f32.mrf.mxu0
        %v784 = vadd.f32 %v705, %v783
        %v785 = vpop.f32.mrf.mxu0
        %786 = vmatprep.mubr.f32.mxu0 %v643
        %787 = vmatmul.mubr.f32.gmra.mxu0 %v642
        %v788 = vpop.f32.mrf.mxu0
        %v789 = vadd.f32 %v705, %v788
        %v790 = vpop.f32.mrf.mxu0
        %791 = vmatprep.mubr.f32.mxu0 %v645
        %792 = vmatmul.mubr.f32.gmra.mxu0 %v644
        %v793 = vpop.f32.mrf.mxu0
        %v794 = vadd.f32 %v705, %v793
        %v795 = vpop.f32.mrf.mxu0
        %796 = vmatprep.mubr.f32.mxu0 %v647
        %797 = vmatmul.mubr.f32.gmra.mxu0 %v646
        %v798 = vpop.f32.mrf.mxu0
        %v799 = vadd.f32 %v705, %v798
        %v800 = vpop.f32.mrf.mxu0
        %801 = vmatprep.mubr.f32.mxu0 %v649
        %802 = vmatmul.mubr.f32.gmra.mxu0 %v648
        %v803 = vpop.f32.mrf.mxu0
        %v804 = vadd.f32 %v705, %v803
        %v805 = vpop.f32.mrf.mxu0
        %806 = vmatprep.mubr.f32.mxu0 %v651
        %807 = vmatmul.mubr.f32.gmra.mxu0 %v650
        %v808 = vpop.f32.mrf.mxu0
        %v809 = vadd.f32 %v705, %v808
        %v810 = vpop.f32.mrf.mxu0
        %811 = vmatprep.mubr.f32.mxu0 %v653
        %812 = vmatmul.mubr.f32.gmra.mxu0 %v652
        %v813 = vpop.f32.mrf.mxu0
        %v814 = vadd.f32 %v705, %v813
        %v815 = vpop.f32.mrf.mxu0
        %816 = vmatprep.mubr.f32.mxu0 %v655
        %817 = vmatmul.mubr.f32.gmra.mxu0 %v654
        %v818 = vpop.f32.mrf.mxu0
        %v819 = vadd.f32 %v705, %v818
        %v820 = vpop.f32.mrf.mxu0
        %821 = vmatprep.mubr.f32.mxu0 %v657
        %822 = vmatmul.mubr.f32.gmra.mxu0 %v656
        %v823 = vpop.f32.mrf.mxu0
        %v824 = vadd.f32 %v705, %v823
        %v825 = vpop.f32.mrf.mxu0
        %826 = vmatprep.mubr.f32.mxu0 %v659
        %827 = vmatmul.mubr.f32.gmra.mxu0 %v658
        %v828 = vpop.f32.mrf.mxu0
        %v829 = vadd.f32 %v705, %v828
        %v830 = vpop.f32.mrf.mxu0
        %831 = vmatprep.mubr.f32.mxu0 %v661
        %832 = vmatmul.mubr.f32.gmra.mxu0 %v660
        %v833 = vpop.f32.mrf.mxu0
        %v834 = vadd.f32 %v705, %v833
        %v835 = vpop.f32.mrf.mxu0
        %836 = vmatprep.mubr.f32.mxu0 %v663
        %837 = vmatmul.mubr.f32.gmra.mxu0 %v662
        %v838 = vpop.f32.mrf.mxu0
        %v839 = vadd.f32 %v705, %v838
        %v840 = vpop.f32.mrf.mxu0
        %841 = vmatprep.mubr.f32.mxu0 %v665
        %842 = vmatmul.mubr.f32.gmra.mxu0 %v664
        %v843 = vpop.f32.mrf.mxu0
        %v844 = vadd.f32 %v705, %v843
        %v845 = vpop.f32.mrf.mxu0
        %846 = vmatprep.mubr.f32.mxu0 %v667
        %847 = vmatmul.mubr.f32.gmra.mxu0 %v666
        %v848 = vpop.f32.mrf.mxu0
        %v849 = vadd.f32 %v705, %v848
        %v850 = vpop.f32.mrf.mxu0
        %851 = vmatprep.mubr.f32.mxu0 %v669
        %852 = vmatmul.mubr.f32.gmra.mxu0 %v668
        %v853 = vpop.f32.mrf.mxu0
        %v854 = vadd.f32 %v705, %v853
        %v855 = vpop.f32.mrf.mxu0
        %856 = vmatprep.mubr.f32.mxu0 %v671
        %857 = vmatmul.mubr.f32.gmra.mxu0 %v670
        %v858 = vpop.f32.mrf.mxu0
        %v859 = vadd.f32 %v705, %v858
        %v860 = vpop.f32.mrf.mxu0
        %861 = vmatprep.mubr.f32.mxu0 %v673
        %862 = vmatmul.mubr.f32.gmra.mxu0 %v672
        %v863 = vpop.f32.mrf.mxu0
        %v864 = vadd.f32 %v705, %v863
        %v865 = vpop.f32.mrf.mxu0
        %866 = vmatprep.mubr.f32.mxu0 %v675
        %867 = vmatmul.mubr.f32.gmra.mxu0 %v674
        %v868 = vpop.f32.mrf.mxu0
        %v869 = vadd.f32 %v705, %v868
        %v870 = vpop.f32.mrf.mxu0
        %871 = vmatprep.mubr.f32.mxu0 %v677
        %872 = vmatmul.mubr.f32.gmra.mxu0 %v676
        %v873 = vpop.f32.mrf.mxu0
        %v874 = vadd.f32 %v705, %v873
        %v875 = vpop.f32.mrf.mxu0
        %876 = vmatprep.mubr.f32.mxu0 %v679
        %877 = vmatmul.mubr.f32.gmra.mxu0 %v678
        %v878 = vpop.f32.mrf.mxu0
        %v879 = vadd.f32 %v705, %v878
        %v880 = vpop.f32.mrf.mxu0
        %881 = vmatprep.mubr.f32.mxu0 %v681
        %882 = vmatmul.mubr.f32.gmra.mxu0 %v680
        %v883 = vpop.f32.mrf.mxu0
        %v884 = vadd.f32 %v705, %v883
        %v885 = vpop.f32.mrf.mxu0
        %886 = vmatprep.mubr.f32.mxu0 %v683
        %887 = vmatmul.mubr.f32.gmra.mxu0 %v682
        %v888 = vpop.f32.mrf.mxu0
        %v889 = vadd.f32 %v705, %v888
        %v890 = vpop.f32.mrf.mxu0
        %891 = vmatprep.mubr.f32.mxu0 %v685
        %892 = vmatmul.mubr.f32.gmra.mxu0 %v684
        %v893 = vpop.f32.mrf.mxu0
        %v894 = vadd.f32 %v705, %v893
        %v895 = vpop.f32.mrf.mxu0
        %896 = vmatprep.mubr.f32.mxu0 %v687
        %897 = vmatmul.mubr.f32.gmra.mxu0 %v686
        %v898 = vpop.f32.mrf.mxu0
        %v899 = vadd.f32 %v705, %v898
        %v900 = vpop.f32.mrf.mxu0
        %901 = vmatprep.mubr.f32.mxu0 %v689
        %902 = vmatmul.mubr.f32.gmra.mxu0 %v688
        %v903 = vpop.f32.mrf.mxu0
        %v904 = vadd.f32 %v705, %v903
        %v905 = vpop.f32.mrf.mxu0
        %906 = vmatprep.mubr.f32.mxu0 %v691
        %907 = vmatmul.mubr.f32.gmra.mxu0 %v690
        %v908 = vpop.f32.mrf.mxu0
        %v909 = vadd.f32 %v705, %v908
        %v910 = vpop.f32.mrf.mxu0
        %911 = vmatprep.mubr.f32.mxu0 %v693
        %912 = vmatmul.mubr.f32.gmra.mxu0 %v692
        %v913 = vpop.f32.mrf.mxu0
        %v914 = vadd.f32 %v705, %v913
        %v915 = vpop.f32.mrf.mxu0
        %916 = vmatprep.mubr.f32.mxu0 %v695
        %917 = vmatmul.mubr.f32.gmra.mxu0 %v694
        %v918 = vpop.f32.mrf.mxu0
        %v919 = vadd.f32 %v705, %v918
        %v920 = vpop.f32.mrf.mxu0
        %921 = vmatprep.mubr.f32.mxu0 %v697
        %922 = vmatmul.mubr.f32.gmra.mxu0 %v696
        %v923 = vpop.f32.mrf.mxu0
        %v924 = vadd.f32 %v705, %v923
        %v925 = vpop.f32.mrf.mxu0
        %926 = vmatprep.mubr.f32.mxu0 %v699
        %927 = vmatmul.mubr.f32.gmra.mxu0 %v698
        %v928 = vpop.f32.mrf.mxu0
        %v929 = vadd.f32 %v705, %v928
        %v930 = vpop.f32.mrf.mxu0
        %931 = vdwg.mxu0
        %v932 = vmax.f32 %v774, 0.0
        %v933 = vmax.f32 %v779, 0.0
        %v934 = vmax.f32 %v784, 0.0
        %v935 = vmax.f32 %v789, 0.0
        %v936 = vmax.f32 %v794, 0.0
        %v937 = vmax.f32 %v799, 0.0
        %v938 = vmax.f32 %v804, 0.0
        %v939 = vmax.f32 %v809, 0.0
        %v940 = vmax.f32 %v814, 0.0
        %v941 = vmax.f32 %v819, 0.0
        %v942 = vmax.f32 %v824, 0.0
        %v943 = vmax.f32 %v829, 0.0
        %v944 = vmax.f32 %v834, 0.0
        %v945 = vmax.f32 %v839, 0.0
        %v946 = vmax.f32 %v844, 0.0
        %v947 = vmax.f32 %v849, 0.0
        %v948 = vmax.f32 %v854, 0.0
        %v949 = vmax.f32 %v859, 0.0
        %v950 = vmax.f32 %v864, 0.0
        %v951 = vmax.f32 %v869, 0.0
        %v952 = vmax.f32 %v874, 0.0
        %v953 = vmax.f32 %v879, 0.0
        %v954 = vmax.f32 %v884, 0.0
        %v955 = vmax.f32 %v889, 0.0
        %v956 = vmax.f32 %v894, 0.0
        %v957 = vmax.f32 %v899, 0.0
        %v958 = vmax.f32 %v904, 0.0
        %v959 = vmax.f32 %v909, 0.0
        %v960 = vmax.f32 %v914, 0.0
        %v961 = vmax.f32 %v919, 0.0
        %v962 = vmax.f32 %v924, 0.0
        %v963 = vmax.f32 %v929, 0.0
        %v964 = vld [vmem:[%s2] sm:$0xff]
        %v965 = vld [vmem:[%s2 + $0x8] sm:$0xff]
        %v966 = vld [vmem:[%s2 + $0x10] sm:$0xff]
        %v967 = vld [vmem:[%s2 + $0x18] sm:$0xff]
        %968 = vmatprep.subr.mxu0 0.0
        %969 = vmatpush1.msra.mxu0 %v947
        %970 = vmatprep.subr.mxu0 0.0
        %971 = vmatpush1.msra.mxu0 %v946
        %972 = vmatprep.subr.mxu0 0.0
        %973 = vmatpush1.msra.mxu0 %v945
        %974 = vmatprep.subr.mxu0 0.0
        %975 = vmatpush1.msra.mxu0 %v944
        %976 = vmatprep.subr.mxu0 0.0
        %977 = vmatpush1.msra.mxu0 %v943
        %978 = vmatprep.subr.mxu0 0.0
        %979 = vmatpush1.msra.mxu0 %v942
        %980 = vmatprep.subr.mxu0 0.0
        %981 = vmatpush1.msra.mxu0 %v941
        %982 = vmatprep.subr.mxu0 0.0
        %983 = vmatpush1.msra.mxu0 %v940
        %984 = vmatprep.subr.mxu0 0.0
        %985 = vmatpush1.msra.mxu0 %v939
        %986 = vmatprep.subr.mxu0 0.0
        %987 = vmatpush1.msra.mxu0 %v938
        %988 = vmatprep.subr.mxu0 0.0
        %989 = vmatpush1.msra.mxu0 %v937
        %990 = vmatprep.subr.mxu0 0.0
        %991 = vmatpush1.msra.mxu0 %v936
        %992 = vmatprep.subr.mxu0 0.0
        %993 = vmatpush1.msra.mxu0 %v935
        %994 = vmatprep.subr.mxu0 0.0
        %995 = vmatpush1.msra.mxu0 %v934
        %996 = vmatprep.subr.mxu0 0.0
        %997 = vmatpush1.msra.mxu0 %v933
        %998 = vmatprep.subr.mxu0 0.0
        %999 = vmatpush1.msra.mxu0 %v932
        %1000 = vmatprep.subr.mxu0 0.0
        %1001 = vmatpush2.msra.mxu0 %v963
        %1002 = vmatprep.subr.mxu0 0.0
        %1003 = vmatpush2.msra.mxu0 %v962
        %1004 = vmatprep.subr.mxu0 0.0
        %1005 = vmatpush2.msra.mxu0 %v961
        %1006 = vmatprep.subr.mxu0 0.0
        %1007 = vmatpush2.msra.mxu0 %v960
        %1008 = vmatprep.subr.mxu0 0.0
        %1009 = vmatpush2.msra.mxu0 %v959
        %1010 = vmatprep.subr.mxu0 0.0
        %1011 = vmatpush2.msra.mxu0 %v958
        %1012 = vmatprep.subr.mxu0 0.0
        %1013 = vmatpush2.msra.mxu0 %v957
        %1014 = vmatprep.subr.mxu0 0.0
        %1015 = vmatpush2.msra.mxu0 %v956
        %1016 = vmatprep.subr.mxu0 0.0
        %1017 = vmatpush2.msra.mxu0 %v955
        %1018 = vmatprep.subr.mxu0 0.0
        %1019 = vmatpush2.msra.mxu0 %v954
        %1020 = vmatprep.subr.mxu0 0.0
        %1021 = vmatpush2.msra.mxu0 %v953
        %1022 = vmatprep.subr.mxu0 0.0
        %1023 = vmatpush2.msra.mxu0 %v952
        %1024 = vmatprep.subr.mxu0 0.0
        %1025 = vmatpush2.msra.mxu0 %v951
        %1026 = vmatprep.subr.mxu0 0.0
        %1027 = vmatpush2.msra.mxu0 %v950
        %1028 = vmatprep.subr.mxu0 0.0
        %1029 = vmatpush2.msra.mxu0 %v949
        %1030 = vmatprep.subr.mxu0 0.0
        %1031 = vmatpush2.msra.mxu0 %v948
        %1032 = vmatprep.mubr.f32.mxu0 %v965
        %1033 = vmatmul.mubr.f32.gmra.mxu0 %v964
        %v1034 = vpop.f32.mrf.mxu0
        %v1035 = vadd.f32 0.0, %v1034
        %v1036 = vpop.f32.mrf.mxu0
        %1037 = vmatprep.mubr.f32.mxu0 %v967
        %1038 = vmatmul.mubr.f32.gmra.mxu0 %v966
        %v1039 = vpop.f32.mrf.mxu0
        %v1040 = vadd.f32 0.0, %v1039
        %v1041 = vpop.f32.mrf.mxu0
        %1042 = vdwg.mxu0
        %v1043 = vld [vmem:[%s5] sm:$0xff]
        %v1044 = vld [vmem:[%s5 + $0x8] sm:$0xff]
        %v1045 = vld [vmem:[%s5 + $0x10] sm:$0xff]
        %v1046 = vld [vmem:[%s5 + $0x18] sm:$0xff]
        %v1047 = vld [vmem:[%s6] sm:$0x1]
        %v1049 = vlaneseq
        %v1050 = vshrl.u32 %v1049, 7
        %v1051 = vsub.s32 0, %v1050
        %v1052 = vrot.slane %v1047, %v1051
        %vm1054 = vcmask 261120
        %v1056 = vsel %vm1054, %v1035, 0
        %v1059 = vsel %vm1054, %v1040, 0
        %1061 = vmatprep.subr.mxu0 0.0
        %1062 = vmatpush1.msra.mxu0 0.0
        %1063 = vmatprep.subr.mxu0 0.0
        %1064 = vmatpush1.msra.mxu0 0.0
        %1065 = vmatprep.subr.mxu0 0.0
        %1066 = vmatpush1.msra.mxu0 0.0
        %1067 = vmatprep.subr.mxu0 0.0
        %1068 = vmatpush1.msra.mxu0 0.0
        %1069 = vmatprep.subr.mxu0 0.0
        %1070 = vmatpush1.msra.mxu0 0.0
        %1071 = vmatprep.subr.mxu0 0.0
        %1072 = vmatpush1.msra.mxu0 0.0
        %1073 = vmatprep.subr.mxu0 0.0
        %1074 = vmatpush1.msra.mxu0 0.0
        %1075 = vmatprep.subr.mxu0 0.0
        %1076 = vmatpush1.msra.mxu0 0.0
        %1077 = vmatprep.subr.mxu0 0.0
        %1078 = vmatpush1.msra.mxu0 0.0
        %1079 = vmatprep.subr.mxu0 0.0
        %1080 = vmatpush1.msra.mxu0 0.0
        %1081 = vmatprep.subr.mxu0 0.0
        %1082 = vmatpush1.msra.mxu0 0.0
        %1083 = vmatprep.subr.mxu0 0.0
        %1084 = vmatpush1.msra.mxu0 0.0
        %1085 = vmatprep.subr.mxu0 0.0
        %1086 = vmatpush1.msra.mxu0 %v1046
        %1087 = vmatprep.subr.mxu0 0.0
        %1088 = vmatpush1.msra.mxu0 %v1045
        %1089 = vmatprep.subr.mxu0 0.0
        %1090 = vmatpush1.msra.mxu0 %v1044
        %1091 = vmatprep.subr.mxu0 0.0
        %1092 = vmatpush1.msra.mxu0 %v1043
        %1093 = vmatprep.subr.mxu0 0.0
        %1094 = vmatpush2.msra.mxu0 0.0
        %1095 = vmatprep.subr.mxu0 0.0
        %1096 = vmatpush2.msra.mxu0 0.0
        %1097 = vmatprep.subr.mxu0 0.0
        %1098 = vmatpush2.msra.mxu0 0.0
        %1099 = vmatprep.subr.mxu0 0.0
        %1100 = vmatpush2.msra.mxu0 0.0
        %1101 = vmatprep.subr.mxu0 0.0
        %1102 = vmatpush2.msra.mxu0 0.0
        %1103 = vmatprep.subr.mxu0 0.0
        %1104 = vmatpush2.msra.mxu0 0.0
        %1105 = vmatprep.subr.mxu0 0.0
        %1106 = vmatpush2.msra.mxu0 0.0
        %1107 = vmatprep.subr.mxu0 0.0
        %1108 = vmatpush2.msra.mxu0 0.0
        %1109 = vmatprep.subr.mxu0 0.0
        %1110 = vmatpush2.msra.mxu0 0.0
        %1111 = vmatprep.subr.mxu0 0.0
        %1112 = vmatpush2.msra.mxu0 0.0
        %1113 = vmatprep.subr.mxu0 0.0
        %1114 = vmatpush2.msra.mxu0 0.0
        %1115 = vmatprep.subr.mxu0 0.0
        %1116 = vmatpush2.msra.mxu0 0.0
        %1117 = vmatprep.subr.mxu0 0.0
        %1118 = vmatpush2.msra.mxu0 0.0
        %1119 = vmatprep.subr.mxu0 0.0
        %1120 = vmatpush2.msra.mxu0 0.0
        %1121 = vmatprep.subr.mxu0 0.0
        %1122 = vmatpush2.msra.mxu0 0.0
        %1123 = vmatprep.subr.mxu0 0.0
        %1124 = vmatpush2.msra.mxu0 0.0
        %1125 = vmatprep.mubr.f32.mxu0 0.0
        %1126 = vmatmul.mubr.f32.gmra.mxu0 %v1056
        %v1127 = vpop.f32.mrf.mxu0
        %v1128 = vadd.f32 %v1052, %v1127
        %v1129 = vpop.f32.mrf.mxu0
        %1130 = vmatprep.mubr.f32.mxu0 0.0
        %1131 = vmatmul.mubr.f32.gmra.mxu0 %v1059
        %v1132 = vpop.f32.mrf.mxu0
        %v1133 = vadd.f32 %v1052, %v1132
        %v1134 = vpop.f32.mrf.mxu0
        %1135 = vdwg.mxu0
        %1136 = vst [vmem:[%s312] sm:$0xff] %v1128
        %1137 = vst [vmem:[%s312 + $0x8] sm:$0xff] %v1133
        %s1138 = sand.u32 %s185, 1
        %s1139 = scalar_lea.sflag [#allocation4], %s1138
        %s1140 = sand.u32 %s185, 1
        %s1141 = smul.addr %s1140, 16
        %s1142 = scalar_lea.vmem [#allocation7], %s1141
        // Predicated region
        $region57: #{tpu_custom_call.1} parent=47 // pred_check
          %p1143 = pneg %p195
        $region58: #{tpu_custom_call.1} parent=47 // pred_check_branch
          %1145 = sbr.rel (%p1143) target = $region60
        $region59: #{tpu_custom_call.1} parent=47 // pred_region
          %s1146 = smul.u32 2, %s25
          %s1148 = ssub.s32 256, 256
          %1149 = vsyncadd %s1139, %s1148
          %s1150 = smul.addr %s1146, 128
          %s1151 = scalar_lea.hbm %s7, %s1150
          %s1152 = sshll.u32 %s1142, 4
          %s1153 = int_to_ptr.vmem [resolvable:$true] %s1152
          %1158 = dma.vmem_to_hbm [thread:$0]  %s1153, 256, %s1151, %s1139, 128, 128, 8
        $region60: #{tpu_custom_call.1} parent=47 // pred_fallthru
          _
      $region48: #{tpu_custom_call.1} parent=5 // pred_fallthru
        _
      %p1159 = scmp.le.s32.totalorder 2, %s20
      // Predicated region
      $region61: #{tpu_custom_call.1} parent=5 // pred_check
        %p1160 = pneg %p1159
      $region62: #{tpu_custom_call.1} parent=5 // pred_check_branch
        %1162 = sbr.rel (%p1160) target = $region64
      $region63: #{tpu_custom_call.1} parent=5 // pred_region
        %s1163 = ssub.s32 %s20, 2
        // Predicated region
        $region65: #{tpu_custom_call.1} parent=63 // pred_check
          %p1164 = pneg %p201
        $region66: #{tpu_custom_call.1} parent=63 // pred_check_branch
          %1166 = sbr.rel (%p1164) target = $region68
        $region67: #{tpu_custom_call.1} parent=63 // pred_region
          %s1167 = sand.u32 %s186, 1
          %s1168 = scalar_lea.sflag [#allocation4], %s1167
          %s1169 = sand.u32 %s186, 1
          %s1170 = smul.addr %s1169, 16
          %s1171 = scalar_lea.vmem [#allocation7], %s1170
          %1172 = dma.done %s1168, 256
        $region68: #{tpu_custom_call.1} parent=63 // pred_fallthru
          _
      $region64: #{tpu_custom_call.1} parent=5 // pred_fallthru
        _
    $region6: #{tpu_custom_call.1} parent=1 // loop_footer
      %s24 = sadd.s32 1, %s20
    $region7: #{tpu_custom_call.1} parent=1 // loop_footer_branch
      %19 = sbr.rel target = $region3
    $region8: #{tpu_custom_call.1} parent=1 // loop_exit
      _
    %1173 = vsyncpa [#allocation3], 1
    %s1174 = scalar_lea.sflag [#allocation3], 1
    %1175 = vsyncpa %s1174, 1
    %1176 = vsyncpa [#allocation6], 1
    %1177 = vsyncpa [#allocation4], 1
    %s1178 = scalar_lea.sflag [#allocation4], 1
    %1179 = vsyncpa %s1178, 1

</llo_original>
